<compile_context>
chip_gen: v7x
topology: tpu7x:2x2x1
jax: 0.10.0
libtpu: 0.0.40
codegen_flags: <defaults>
</compile_context>

<pallas_src>
import functools

import jax
import jax.numpy as jnp
from jax.experimental import pallas as pl
from jax.experimental.pallas import tpu as pltpu


_PHASES = ((0, 0), (0, 1), (1, 0), (1, 1))   # output-pixel parity (r, s)


# ------------------------------ Pallas kernel -------------------------------

def _deconv_in_kernel(xt_ref, bt_ref, bias_ref, o_ref, acc_ref, *,
                      apply_norm, eps, inv_count):
    """One (image, cout-tile, K-tile) grid step.

    xt_ref:   (1, 6, kt, HW)     bf16  column-pair window slabs of ReLU(pad(x)):
                                 slab 2*wy+s = [win(wy,s); win(wy,s+1)] along channels,
                                 win(wy,wx)[ci, a*W+b] = relu(pad(x))[ci, a+wy, b+wx]
    bt_ref:   (8, cout_t, kt)    bf16  weights; row q = 2*p+dh packs taps (dh,0),(dh,1)
    bias_ref: (cout_t, 1)        f32
    o_ref:    (1, 4, cout_t, HW) f32   phase-major output (lane-dense last dim = H*W)
    acc_ref:  (4, cout_t, HW)    f32   accumulator, resident across the K grid axis
    """
    k = pl.program_id(2)

    @pl.when(k == 0)
    def _init():
        # Fold the bias into the accumulator init (saves a full VPU pass at finalize).
        acc_ref[...] = jnp.broadcast_to(bias_ref[...][None], acc_ref.shape)

    # 4 sub-convolutions; each is 2 MXU dots with K = kt (packed 2*cin_t), f32 accum.
    for p, (r, s) in enumerate(_PHASES):
        acc = acc_ref[p]
        for dh in (0, 1):
            w = bt_ref[2 * p + dh]              # (cout_t, kt)       bf16
            xs = xt_ref[0, 2 * (r + dh) + s]    # (kt, HW)           bf16
            acc = acc + jnp.dot(w, xs, preferred_element_type=jnp.float32)
        acc_ref[p] = acc

    @pl.when(k == pl.num_programs(2) - 1)
    def _finalize():
        if apply_norm:
            # Pass 1: per-(image, channel) sum / sum-of-squares columns only.
            ssum = acc_ref[0].sum(axis=-1, keepdims=True)
            ssq = (acc_ref[0] * acc_ref[0]).sum(axis=-1, keepdims=True)
            for p in range(1, 4):
                a = acc_ref[p]
                ssum = ssum + a.sum(axis=-1, keepdims=True)
                ssq = ssq + (a * a).sum(axis=-1, keepdims=True)
            mean = ssum * inv_count
            var = jnp.maximum(ssq * inv_count - mean * mean, 0.0)
            inv_std = jax.lax.rsqrt(var + eps)
            # Pass 2: stream one phase slab at a time (bounded live temporaries).
            for p in range(4):
                o_ref[0, p] = (acc_ref[p] - mean) * inv_std
        else:
            for p in range(4):
                o_ref[0, p] = acc_ref[p]


# --------------------------- tiling / VMEM budgets ---------------------------

def _vmem_budget_bytes():
    """Generation-aware VMEM budget: ~96 MiB on v5e/v6e, <= ~44 MiB on v7x."""
    cap = 64 * 2**20                       # conservative default (v7x per-TensorCore)
    try:
        cap = int(getattr(pltpu.get_tpu_info(), "vmem_capacity_bytes", cap))
    except Exception:
        pass
    if cap >= 100 * 2**20:                 # v5e / v6e: 128 MiB physical
        return 96 * 2**20
    return min(44 * 2**20, int(cap * 0.7))  # v7x: 64 MiB physical, leave headroom


def _step_vmem_bytes(cout_t, kt, hw):
    """Per-grid-step VMEM: resident f32 accumulator + double-buffered in/out blocks."""
    acc = 4 * cout_t * hw * 4              # f32 accumulator (resident scratch)
    xt = 6 * kt * hw * 2                   # bf16 input block
    bt = 8 * cout_t * kt * 2               # bf16 weight block
    bias = cout_t * 4
    out = 4 * cout_t * hw * 4              # f32 output block
    return acc + 2 * (xt + bt + bias + out)


def _choose_tiles(k2, cout, hw, budget_bytes):
    """Pick (cout_t, kt).

    Prefer full Cout (avoids re-DMA of the XT block per cout tile) and full packed K.
    Shrink the reduction tile first (kept a multiple of 128: it is the lane dim of the
    BT block); only then shrink cout_t, never below min(Cout, 256) so the MXU M
    dimension stays filled.
    """
    kt, ct = k2, cout
    while _step_vmem_bytes(ct, kt, hw) > budget_bytes and kt % 256 == 0:
        kt //= 2
    cout_floor = min(cout, 256)
    while (_step_vmem_bytes(ct, kt, hw) > budget_bytes
           and ct % 16 == 0 and ct // 2 >= cout_floor):
        ct //= 2
    # TODO(synk): very large images (H*W so big that even minimal tiles exceed the
    # budget) need an HW grid axis + two-pass InstanceNorm (per-tile sum/sumsq
    # partials); not implemented here.
    return ct, kt


# ------------------------------- JAX wrapper ---------------------------------

def deconv_block_forward(x, weight, bias, *, batch_norm=True, dropout=False, eps=1e-5):
    """DeconvBlock forward: InstanceNorm2d(ConvTranspose2d(ReLU(x))), k=4, s=2, p=1.

    x:      (N, Cin, H, W)    float32, NCHW
    weight: (Cin, Cout, 4, 4) float32 (PyTorch ConvTranspose2d layout)
    bias:   (Cout,)           float32
    """
    if dropout:
        # TODO(synk): training-mode Dropout(0.5) not implemented in the fused kernel
        # (module default is dropout=False) -- fail loudly instead of silently skipping.
        raise NotImplementedError("DeconvBlock Pallas kernel: dropout=True not supported")

    N, Cin, H, W = x.shape
    Cout = weight.shape[1]
    assert weight.shape == (Cin, Cout, 4, 4), weight.shape
    H2, W2, HW = 2 * H, 2 * W, H * W
    K2 = 2 * Cin                                    # packed contraction size per dot

    # ReLU on the un-expanded input (commutes with zero-pad), cast to bf16 once,
    # then zero-pad by 1.
    xr = jnp.maximum(x, 0.0).astype(jnp.bfloat16)
    xp = jnp.pad(xr, ((0, 0), (0, 0), (1, 1), (1, 1)))

    # TODO(synk): the window slabs are still materialized in HBM (6 column-pair bf16
    # slabs).  Generating them in-kernel from a 1x padded input tile would cut X HBM
    # traffic further, but needs in-kernel relayouts; deferred.
    def win(wy, wx):
        return xp[:, :, wy:wy + H, wx:wx + W].reshape(N, Cin, HW)

    # XT[n, 2*wy+s] = concat([win(wy, s), win(wy, s+1)], channel)  -> (N, 6, 2*Cin, HW)
    XT = jnp.stack(
        [jnp.concatenate([win(wy, s), win(wy, s + 1)], axis=1)
         for wy in range(3) for s in range(2)], axis=1)

    # Weight repack for the 4 sub-convolutions (kernel taps kh = 3-r-2*dh, kw = 3-s-2*dw),
    # column-pair packed to match XT's K ordering:
    #   BT[2*p+dh] = concat([w_oc[:, :, 3-r-2dh, 3-s], w_oc[:, :, 3-r-2dh, 1-s]], cin)
    w_oc = jnp.transpose(weight, (1, 0, 2, 3)).astype(jnp.bfloat16)   # (Cout, Cin, 4, 4)
    BT = jnp.stack(
        [jnp.concatenate([w_oc[:, :, 3 - r - 2 * dh, 3 - s],
                          w_oc[:, :, 3 - r - 2 * dh, 1 - s]], axis=1)
         for (r, s) in _PHASES for dh in (0, 1)], axis=0)             # (8, Cout, 2*Cin)
    bias2 = bias.reshape(Cout, 1).astype(jnp.float32)

    budget = _vmem_budget_bytes()
    cout_t, kt = _choose_tiles(K2, Cout, HW, int(budget * 0.85))
    grid = (N, Cout // cout_t, K2 // kt)            # parallel x parallel x reduction

    # Explicit VMEM limit: per-step footprint + headroom for finalize temporaries and
    # Mosaic internal scratch, capped by the generation-aware budget.
    need = _step_vmem_bytes(cout_t, kt, HW) + 4 * cout_t * HW * 4 + (2 << 20)
    vmem_limit = int(min(budget, max(need, 16 * 2**20)))

    cost = pl.CostEstimate(
        flops=int(2 * N * Cout * (4 * HW) * (4 * Cin)),
        transcendentals=int(N * Cout) if batch_norm else 0,
        bytes_accessed=int(2 * (XT.size + BT.size) + 4 * (bias2.size + N * 4 * Cout * HW)),
    )

    kernel = functools.partial(
        _deconv_in_kernel, apply_norm=batch_norm, eps=float(eps),
        inv_count=1.0 / float(4 * HW))

    y_ph = pl.pallas_call(
        kernel,
        out_shape=jax.ShapeDtypeStruct((N, 4, Cout, HW), jnp.float32),
        grid_spec=pltpu.PrefetchScalarGridSpec(
            num_scalar_prefetch=0,
            grid=grid,
            in_specs=[
                pl.BlockSpec((1, 6, kt, HW), lambda n, c, k: (n, 0, k, 0)),
                pl.BlockSpec((8, cout_t, kt), lambda n, c, k: (0, c, k)),
                pl.BlockSpec((cout_t, 1), lambda n, c, k: (c, 0)),
            ],
            out_specs=pl.BlockSpec((1, 4, cout_t, HW), lambda n, c, k: (n, 0, c, 0)),
            scratch_shapes=[pltpu.VMEM((4, cout_t, HW), jnp.float32)],
        ),
        compiler_params=pltpu.CompilerParams(
            dimension_semantics=("parallel", "parallel", "arbitrary"),
            vmem_limit_bytes=vmem_limit,
        ),
        cost_estimate=cost,
    )(XT, BT, bias2)

    # Pixel-shuffle interleave to NCHW: y[n, co, 2a+r, 2b+s] = y_ph[n, 2r+s, co, a*W+b].
    # TODO(synk): fusing the s-parity lane interleave into the kernel (out_shape
    # (N, Cout, H, 2, 2W) + pure-reshape epilogue) would remove this ~2x|y| transpose.
    y = (y_ph.reshape(N, 2, 2, Cout, H, W)
             .transpose(0, 3, 4, 1, 5, 2)
             .reshape(N, Cout, H2, W2))
    return y


# -------------------------------- reference ----------------------------------

def _ref_forward(x, weight, bias, batch_norm=True, eps=1e-5):
    xr = jax.nn.relu(x)
    rhs = jnp.transpose(weight[:, :, ::-1, ::-1], (1, 0, 2, 3))   # OIHW, spatially flipped
    y = jax.lax.conv_general_dilated(
        xr, rhs, window_strides=(1, 1), padding=((2, 2), (2, 2)),
        lhs_dilation=(2, 2), dimension_numbers=("NCHW", "OIHW", "NCHW"))
    y = y + bias[None, :, None, None]
    if not batch_norm:
        return y
    mean = y.mean(axis=(2, 3), keepdims=True)
    var = ((y - mean) ** 2).mean(axis=(2, 3), keepdims=True)
    return (y - mean) / jnp.sqrt(var + eps)


# ----------------------------------- main -------------------------------------

if __name__ == "__main__":
    key = jax.random.PRNGKey(0)
    k_x, k_w, k_b = jax.random.split(key, 3)

    configs = [
        # (N, Cin, Cout, H, W, batch_norm)
        (2, 4, 8, 16, 16, True),      # primary small config
        (1, 8, 16, 16, 16, True),     # N=1, wider channels
        (2, 4, 8, 16, 16, False),     # batch_norm=False path
    ]
    for (N, Cin, Cout, H, W, bn) in configs:
        x = jax.random.normal(k_x, (N, Cin, H, W), dtype=jnp.float32)
        weight = jax.random.normal(k_w, (Cin, Cout, 4, 4), dtype=jnp.float32) * 0.1
        bias = jax.random.normal(k_b, (Cout,), dtype=jnp.float32) * 0.1

        fwd = jax.jit(functools.partial(deconv_block_forward, batch_norm=bn))
        out = jax.block_until_ready(fwd(x, weight, bias))

        ref = _ref_forward(x, weight, bias, batch_norm=bn)
        assert out.shape == (N, Cout, 2 * H, 2 * W), out.shape
        max_err = float(jnp.max(jnp.abs(out - ref)))
        # bf16 MXU operands with f32 accumulation -> loosened elementwise tolerance.
        assert jnp.allclose(out, ref, rtol=5e-2, atol=5e-2), \
            (N, Cin, Cout, H, W, bn, max_err)

    print("KERNEL_OK")
</pallas_src>

<mosaic_0001>
module attributes {stable_mosaic.version = 11 : i64} {
  func.func @_deconv_in_kernel(%arg0: i32, %arg1: i32, %arg2: i32, %arg3: memref<1x6x8x256xbf16, #tpu.memory_space<vmem>>, %arg4: memref<8x8x8xbf16, #tpu.memory_space<vmem>>, %arg5: memref<8x1xf32, #tpu.memory_space<vmem>>, %arg6: memref<1x4x8x256xf32, #tpu.memory_space<vmem>>, %arg7: memref<4x8x256xf32, #tpu.memory_space<vmem>>) attributes {dimension_semantics = [#tpu.dimension_semantics<parallel>, #tpu.dimension_semantics<parallel>, #tpu.dimension_semantics<arbitrary>], iteration_bounds = array<i64: 2, 1, 1>, scalar_prefetch = 0 : i64, scratch_operands = 1 : i64, tpu.core_type = #tpu.core_type<tc>, window_params = [{transform_indices = @transform_0, window_bounds = array<i64: 1, 6, 8, 256>}, {transform_indices = @transform_1, window_bounds = array<i64: 8, 8, 8>}, {transform_indices = @transform_2, window_bounds = array<i64: 8, 1>}, {transform_indices = @transform_3, window_bounds = array<i64: 1, 4, 8, 256>}]} {
    %c0_i32 = arith.constant 0 : i32
    %0 = arith.cmpi eq, %arg2, %c0_i32 : i32
    %1 = arith.extui %0 : i1 to i32
    %c0_i32_0 = arith.constant 0 : i32
    %2 = arith.cmpi ne, %1, %c0_i32_0 : i32
    scf.if %2 {
      %c0_82 = arith.constant 0 : index
      %c0_83 = arith.constant 0 : index
      %74 = vector.load %arg5[%c0_82, %c0_83] : memref<8x1xf32, #tpu.memory_space<vmem>>, vector<8x1xf32>
      %75 = vector.shape_cast %74 : vector<8x1xf32> to vector<1x8x1xf32>
      %76 = vector.shape_cast %75 : vector<1x8x1xf32> to vector<1x8x1xf32>
      %77 = vector.broadcast %76 : vector<1x8x1xf32> to vector<4x8x256xf32>
      %c0_84 = arith.constant 0 : index
      %c0_85 = arith.constant 0 : index
      %c0_86 = arith.constant 0 : index
      %78 = vector.load %arg7[%c0_84, %c0_85, %c0_86] : memref<4x8x256xf32, #tpu.memory_space<vmem>>, vector<4x8x256xf32>
      tpu.vector_store %arg7[%c0_84, %c0_85, %c0_86], %77 {strides = array<i32>} : memref<4x8x256xf32, #tpu.memory_space<vmem>>, vector<4x8x256xf32>,
    } else {
    }
    %c0 = arith.constant 0 : index
    %c0_1 = arith.constant 0 : index
    %c0_2 = arith.constant 0 : index
    %3 = vector.load %arg7[%c0, %c0_1, %c0_2] : memref<4x8x256xf32, #tpu.memory_space<vmem>>, vector<1x8x256xf32>
    %4 = vector.shape_cast %3 : vector<1x8x256xf32> to vector<8x256xf32>
    %c0_3 = arith.constant 0 : index
    %c0_4 = arith.constant 0 : index
    %c0_5 = arith.constant 0 : index
    %5 = vector.load %arg4[%c0_3, %c0_4, %c0_5] : memref<8x8x8xbf16, #tpu.memory_space<vmem>>, vector<1x8x8xbf16>
    %6 = vector.shape_cast %5 : vector<1x8x8xbf16> to vector<8x8xbf16>
    %c0_6 = arith.constant 0 : index
    %c0_7 = arith.constant 0 : index
    %c0_8 = arith.constant 0 : index
    %c0_9 = arith.constant 0 : index
    %7 = vector.load %arg3[%c0_6, %c0_7, %c0_8, %c0_9] : memref<1x6x8x256xbf16, #tpu.memory_space<vmem>>, vector<1x1x8x256xbf16>
    %8 = vector.shape_cast %7 : vector<1x1x8x256xbf16> to vector<8x256xbf16>
    %cst = arith.constant dense<0.000000e+00> : vector<8x256xf32>
    %9 = tpu.matmul %6, %8, %cst {dimension_numbers = #tpu.dot_dimension_numbers<[1], [0], [0], [1], [0, 0, 1, 1], [], []>} : vector<8x8xbf16>, vector<8x256xbf16>, vector<8x256xf32> -> vector<8x256xf32>
    %10 = arith.addf %4, %9 : vector<8x256xf32>
    %c1 = arith.constant 1 : index
    %c0_10 = arith.constant 0 : index
    %c0_11 = arith.constant 0 : index
    %11 = vector.load %arg4[%c1, %c0_10, %c0_11] : memref<8x8x8xbf16, #tpu.memory_space<vmem>>, vector<1x8x8xbf16>
    %12 = vector.shape_cast %11 : vector<1x8x8xbf16> to vector<8x8xbf16>
    %c0_12 = arith.constant 0 : index
    %c2 = arith.constant 2 : index
    %c0_13 = arith.constant 0 : index
    %c0_14 = arith.constant 0 : index
    %13 = vector.load %arg3[%c0_12, %c2, %c0_13, %c0_14] : memref<1x6x8x256xbf16, #tpu.memory_space<vmem>>, vector<1x1x8x256xbf16>
    %14 = vector.shape_cast %13 : vector<1x1x8x256xbf16> to vector<8x256xbf16>
    %cst_15 = arith.constant dense<0.000000e+00> : vector<8x256xf32>
    %15 = tpu.matmul %12, %14, %cst_15 {dimension_numbers = #tpu.dot_dimension_numbers<[1], [0], [0], [1], [0, 0, 1, 1], [], []>} : vector<8x8xbf16>, vector<8x256xbf16>, vector<8x256xf32> -> vector<8x256xf32>
    %16 = arith.addf %10, %15 : vector<8x256xf32>
    %c0_16 = arith.constant 0 : index
    %c0_17 = arith.constant 0 : index
    %c0_18 = arith.constant 0 : index
    %17 = vector.load %arg7[%c0_16, %c0_17, %c0_18] : memref<4x8x256xf32, #tpu.memory_space<vmem>>, vector<1x8x256xf32>
    %18 = vector.shape_cast %17 : vector<1x8x256xf32> to vector<8x256xf32>
    %19 = vector.shape_cast %16 : vector<8x256xf32> to vector<1x8x256xf32>
    tpu.vector_store %arg7[%c0_16, %c0_17, %c0_18], %19 {strides = array<i32>} : memref<4x8x256xf32, #tpu.memory_space<vmem>>, vector<1x8x256xf32>,
    %c1_19 = arith.constant 1 : index
    %c0_20 = arith.constant 0 : index
    %c0_21 = arith.constant 0 : index
    %20 = vector.load %arg7[%c1_19, %c0_20, %c0_21] : memref<4x8x256xf32, #tpu.memory_space<vmem>>, vector<1x8x256xf32>
    %21 = vector.shape_cast %20 : vector<1x8x256xf32> to vector<8x256xf32>
    %c2_22 = arith.constant 2 : index
    %c0_23 = arith.constant 0 : index
    %c0_24 = arith.constant 0 : index
    %22 = vector.load %arg4[%c2_22, %c0_23, %c0_24] : memref<8x8x8xbf16, #tpu.memory_space<vmem>>, vector<1x8x8xbf16>
    %23 = vector.shape_cast %22 : vector<1x8x8xbf16> to vector<8x8xbf16>
    %c0_25 = arith.constant 0 : index
    %c1_26 = arith.constant 1 : index
    %c0_27 = arith.constant 0 : index
    %c0_28 = arith.constant 0 : index
    %24 = vector.load %arg3[%c0_25, %c1_26, %c0_27, %c0_28] : memref<1x6x8x256xbf16, #tpu.memory_space<vmem>>, vector<1x1x8x256xbf16>
    %25 = vector.shape_cast %24 : vector<1x1x8x256xbf16> to vector<8x256xbf16>
    %cst_29 = arith.constant dense<0.000000e+00> : vector<8x256xf32>
    %26 = tpu.matmul %23, %25, %cst_29 {dimension_numbers = #tpu.dot_dimension_numbers<[1], [0], [0], [1], [0, 0, 1, 1], [], []>} : vector<8x8xbf16>, vector<8x256xbf16>, vector<8x256xf32> -> vector<8x256xf32>
    %27 = arith.addf %21, %26 : vector<8x256xf32>
    %c3 = arith.constant 3 : index
    %c0_30 = arith.constant 0 : index
    %c0_31 = arith.constant 0 : index
    %28 = vector.load %arg4[%c3, %c0_30, %c0_31] : memref<8x8x8xbf16, #tpu.memory_space<vmem>>, vector<1x8x8xbf16>
    %29 = vector.shape_cast %28 : vector<1x8x8xbf16> to vector<8x8xbf16>
    %c0_32 = arith.constant 0 : index
    %c3_33 = arith.constant 3 : index
    %c0_34 = arith.constant 0 : index
    %c0_35 = arith.constant 0 : index
    %30 = vector.load %arg3[%c0_32, %c3_33, %c0_34, %c0_35] : memref<1x6x8x256xbf16, #tpu.memory_space<vmem>>, vector<1x1x8x256xbf16>
    %31 = vector.shape_cast %30 : vector<1x1x8x256xbf16> to vector<8x256xbf16>
    %cst_36 = arith.constant dense<0.000000e+00> : vector<8x256xf32>
    %32 = tpu.matmul %29, %31, %cst_36 {dimension_numbers = #tpu.dot_dimension_numbers<[1], [0], [0], [1], [0, 0, 1, 1], [], []>} : vector<8x8xbf16>, vector<8x256xbf16>, vector<8x256xf32> -> vector<8x256xf32>
    %33 = arith.addf %27, %32 : vector<8x256xf32>
    %c1_37 = arith.constant 1 : index
    %c0_38 = arith.constant 0 : index
    %c0_39 = arith.constant 0 : index
    %34 = vector.load %arg7[%c1_37, %c0_38, %c0_39] : memref<4x8x256xf32, #tpu.memory_space<vmem>>, vector<1x8x256xf32>
    %35 = vector.shape_cast %34 : vector<1x8x256xf32> to vector<8x256xf32>
    %36 = vector.shape_cast %33 : vector<8x256xf32> to vector<1x8x256xf32>
    tpu.vector_store %arg7[%c1_37, %c0_38, %c0_39], %36 {strides = array<i32>} : memref<4x8x256xf32, #tpu.memory_space<vmem>>, vector<1x8x256xf32>,
    %c2_40 = arith.constant 2 : index
    %c0_41 = arith.constant 0 : index
    %c0_42 = arith.constant 0 : index
    %37 = vector.load %arg7[%c2_40, %c0_41, %c0_42] : memref<4x8x256xf32, #tpu.memory_space<vmem>>, vector<1x8x256xf32>
    %38 = vector.shape_cast %37 : vector<1x8x256xf32> to vector<8x256xf32>
    %c4 = arith.constant 4 : index
    %c0_43 = arith.constant 0 : index
    %c0_44 = arith.constant 0 : index
    %39 = vector.load %arg4[%c4, %c0_43, %c0_44] : memref<8x8x8xbf16, #tpu.memory_space<vmem>>, vector<1x8x8xbf16>
    %40 = vector.shape_cast %39 : vector<1x8x8xbf16> to vector<8x8xbf16>
    %c0_45 = arith.constant 0 : index
    %c2_46 = arith.constant 2 : index
    %c0_47 = arith.constant 0 : index
    %c0_48 = arith.constant 0 : index
    %41 = vector.load %arg3[%c0_45, %c2_46, %c0_47, %c0_48] : memref<1x6x8x256xbf16, #tpu.memory_space<vmem>>, vector<1x1x8x256xbf16>
    %42 = vector.shape_cast %41 : vector<1x1x8x256xbf16> to vector<8x256xbf16>
    %cst_49 = arith.constant dense<0.000000e+00> : vector<8x256xf32>
    %43 = tpu.matmul %40, %42, %cst_49 {dimension_numbers = #tpu.dot_dimension_numbers<[1], [0], [0], [1], [0, 0, 1, 1], [], []>} : vector<8x8xbf16>, vector<8x256xbf16>, vector<8x256xf32> -> vector<8x256xf32>
    %44 = arith.addf %38, %43 : vector<8x256xf32>
    %c5 = arith.constant 5 : index
    %c0_50 = arith.constant 0 : index
    %c0_51 = arith.constant 0 : index
    %45 = vector.load %arg4[%c5, %c0_50, %c0_51] : memref<8x8x8xbf16, #tpu.memory_space<vmem>>, vector<1x8x8xbf16>
    %46 = vector.shape_cast %45 : vector<1x8x8xbf16> to vector<8x8xbf16>
    %c0_52 = arith.constant 0 : index
    %c4_53 = arith.constant 4 : index
    %c0_54 = arith.constant 0 : index
    %c0_55 = arith.constant 0 : index
    %47 = vector.load %arg3[%c0_52, %c4_53, %c0_54, %c0_55] : memref<1x6x8x256xbf16, #tpu.memory_space<vmem>>, vector<1x1x8x256xbf16>
    %48 = vector.shape_cast %47 : vector<1x1x8x256xbf16> to vector<8x256xbf16>
    %cst_56 = arith.constant dense<0.000000e+00> : vector<8x256xf32>
    %49 = tpu.matmul %46, %48, %cst_56 {dimension_numbers = #tpu.dot_dimension_numbers<[1], [0], [0], [1], [0, 0, 1, 1], [], []>} : vector<8x8xbf16>, vector<8x256xbf16>, vector<8x256xf32> -> vector<8x256xf32>
    %50 = arith.addf %44, %49 : vector<8x256xf32>
    %c2_57 = arith.constant 2 : index
    %c0_58 = arith.constant 0 : index
    %c0_59 = arith.constant 0 : index
    %51 = vector.load %arg7[%c2_57, %c0_58, %c0_59] : memref<4x8x256xf32, #tpu.memory_space<vmem>>, vector<1x8x256xf32>
    %52 = vector.shape_cast %51 : vector<1x8x256xf32> to vector<8x256xf32>
    %53 = vector.shape_cast %50 : vector<8x256xf32> to vector<1x8x256xf32>
    tpu.vector_store %arg7[%c2_57, %c0_58, %c0_59], %53 {strides = array<i32>} : memref<4x8x256xf32, #tpu.memory_space<vmem>>, vector<1x8x256xf32>,
    %c3_60 = arith.constant 3 : index
    %c0_61 = arith.constant 0 : index
    %c0_62 = arith.constant 0 : index
    %54 = vector.load %arg7[%c3_60, %c0_61, %c0_62] : memref<4x8x256xf32, #tpu.memory_space<vmem>>, vector<1x8x256xf32>
    %55 = vector.shape_cast %54 : vector<1x8x256xf32> to vector<8x256xf32>
    %c6 = arith.constant 6 : index
    %c0_63 = arith.constant 0 : index
    %c0_64 = arith.constant 0 : index
    %56 = vector.load %arg4[%c6, %c0_63, %c0_64] : memref<8x8x8xbf16, #tpu.memory_space<vmem>>, vector<1x8x8xbf16>
    %57 = vector.shape_cast %56 : vector<1x8x8xbf16> to vector<8x8xbf16>
    %c0_65 = arith.constant 0 : index
    %c3_66 = arith.constant 3 : index
    %c0_67 = arith.constant 0 : index
    %c0_68 = arith.constant 0 : index
    %58 = vector.load %arg3[%c0_65, %c3_66, %c0_67, %c0_68] : memref<1x6x8x256xbf16, #tpu.memory_space<vmem>>, vector<1x1x8x256xbf16>
    %59 = vector.shape_cast %58 : vector<1x1x8x256xbf16> to vector<8x256xbf16>
    %cst_69 = arith.constant dense<0.000000e+00> : vector<8x256xf32>
    %60 = tpu.matmul %57, %59, %cst_69 {dimension_numbers = #tpu.dot_dimension_numbers<[1], [0], [0], [1], [0, 0, 1, 1], [], []>} : vector<8x8xbf16>, vector<8x256xbf16>, vector<8x256xf32> -> vector<8x256xf32>
    %61 = arith.addf %55, %60 : vector<8x256xf32>
    %c7 = arith.constant 7 : index
    %c0_70 = arith.constant 0 : index
    %c0_71 = arith.constant 0 : index
    %62 = vector.load %arg4[%c7, %c0_70, %c0_71] : memref<8x8x8xbf16, #tpu.memory_space<vmem>>, vector<1x8x8xbf16>
    %63 = vector.shape_cast %62 : vector<1x8x8xbf16> to vector<8x8xbf16>
    %c0_72 = arith.constant 0 : index
    %c5_73 = arith.constant 5 : index
    %c0_74 = arith.constant 0 : index
    %c0_75 = arith.constant 0 : index
    %64 = vector.load %arg3[%c0_72, %c5_73, %c0_74, %c0_75] : memref<1x6x8x256xbf16, #tpu.memory_space<vmem>>, vector<1x1x8x256xbf16>
    %65 = vector.shape_cast %64 : vector<1x1x8x256xbf16> to vector<8x256xbf16>
    %cst_76 = arith.constant dense<0.000000e+00> : vector<8x256xf32>
    %66 = tpu.matmul %63, %65, %cst_76 {dimension_numbers = #tpu.dot_dimension_numbers<[1], [0], [0], [1], [0, 0, 1, 1], [], []>} : vector<8x8xbf16>, vector<8x256xbf16>, vector<8x256xf32> -> vector<8x256xf32>
    %67 = arith.addf %61, %66 : vector<8x256xf32>
    %c3_77 = arith.constant 3 : index
    %c0_78 = arith.constant 0 : index
    %c0_79 = arith.constant 0 : index
    %68 = vector.load %arg7[%c3_77, %c0_78, %c0_79] : memref<4x8x256xf32, #tpu.memory_space<vmem>>, vector<1x8x256xf32>
    %69 = vector.shape_cast %68 : vector<1x8x256xf32> to vector<8x256xf32>
    %70 = vector.shape_cast %67 : vector<8x256xf32> to vector<1x8x256xf32>
    tpu.vector_store %arg7[%c3_77, %c0_78, %c0_79], %70 {strides = array<i32>} : memref<4x8x256xf32, #tpu.memory_space<vmem>>, vector<1x8x256xf32>,
    %c0_i32_80 = arith.constant 0 : i32
    %71 = arith.cmpi eq, %arg2, %c0_i32_80 : i32
    %72 = arith.extui %71 : i1 to i32
    %c0_i32_81 = arith.constant 0 : i32
    %73 = arith.cmpi ne, %72, %c0_i32_81 : i32
    scf.if %73 {
      %c0_82 = arith.constant 0 : index
      %c0_83 = arith.constant 0 : index
      %c0_84 = arith.constant 0 : index
      %74 = vector.load %arg7[%c0_82, %c0_83, %c0_84] : memref<4x8x256xf32, #tpu.memory_space<vmem>>, vector<1x8x256xf32>
      %75 = vector.shape_cast %74 : vector<1x8x256xf32> to vector<8x256xf32>
      %cst_85 = arith.constant dense<0.000000e+00> : vector<8xf32>
      %76 = vector.multi_reduction <add>, %75, %cst_85 [1] : vector<8x256xf32> to vector<8xf32>
      %77 = vector.shape_cast %76 : vector<8xf32> to vector<8x1xf32>
      %c0_86 = arith.constant 0 : index
      %c0_87 = arith.constant 0 : index
      %c0_88 = arith.constant 0 : index
      %78 = vector.load %arg7[%c0_86, %c0_87, %c0_88] : memref<4x8x256xf32, #tpu.memory_space<vmem>>, vector<1x8x256xf32>
      %79 = vector.shape_cast %78 : vector<1x8x256xf32> to vector<8x256xf32>
      %c0_89 = arith.constant 0 : index
      %c0_90 = arith.constant 0 : index
      %c0_91 = arith.constant 0 : index
      %80 = vector.load %arg7[%c0_89, %c0_90, %c0_91] : memref<4x8x256xf32, #tpu.memory_space<vmem>>, vector<1x8x256xf32>
      %81 = vector.shape_cast %80 : vector<1x8x256xf32> to vector<8x256xf32>
      %82 = arith.mulf %79, %81 : vector<8x256xf32>
      %cst_92 = arith.constant dense<0.000000e+00> : vector<8xf32>
      %83 = vector.multi_reduction <add>, %82, %cst_92 [1] : vector<8x256xf32> to vector<8xf32>
      %84 = vector.shape_cast %83 : vector<8xf32> to vector<8x1xf32>
      %c1_93 = arith.constant 1 : index
      %c0_94 = arith.constant 0 : index
      %c0_95 = arith.constant 0 : index
      %85 = vector.load %arg7[%c1_93, %c0_94, %c0_95] : memref<4x8x256xf32, #tpu.memory_space<vmem>>, vector<1x8x256xf32>
      %86 = vector.shape_cast %85 : vector<1x8x256xf32> to vector<8x256xf32>
      %cst_96 = arith.constant dense<0.000000e+00> : vector<8xf32>
      %87 = vector.multi_reduction <add>, %86, %cst_96 [1] : vector<8x256xf32> to vector<8xf32>
      %88 = vector.shape_cast %87 : vector<8xf32> to vector<8x1xf32>
      %89 = arith.addf %77, %88 : vector<8x1xf32>
      %90 = arith.mulf %86, %86 : vector<8x256xf32>
      %cst_97 = arith.constant dense<0.000000e+00> : vector<8xf32>
      %91 = vector.multi_reduction <add>, %90, %cst_97 [1] : vector<8x256xf32> to vector<8xf32>
      %92 = vector.shape_cast %91 : vector<8xf32> to vector<8x1xf32>
      %93 = arith.addf %84, %92 : vector<8x1xf32>
      %c2_98 = arith.constant 2 : index
      %c0_99 = arith.constant 0 : index
      %c0_100 = arith.constant 0 : index
      %94 = vector.load %arg7[%c2_98, %c0_99, %c0_100] : memref<4x8x256xf32, #tpu.memory_space<vmem>>, vector<1x8x256xf32>
      %95 = vector.shape_cast %94 : vector<1x8x256xf32> to vector<8x256xf32>
      %cst_101 = arith.constant dense<0.000000e+00> : vector<8xf32>
      %96 = vector.multi_reduction <add>, %95, %cst_101 [1] : vector<8x256xf32> to vector<8xf32>
      %97 = vector.shape_cast %96 : vector<8xf32> to vector<8x1xf32>
      %98 = arith.addf %89, %97 : vector<8x1xf32>
      %99 = arith.mulf %95, %95 : vector<8x256xf32>
      %cst_102 = arith.constant dense<0.000000e+00> : vector<8xf32>
      %100 = vector.multi_reduction <add>, %99, %cst_102 [1] : vector<8x256xf32> to vector<8xf32>
      %101 = vector.shape_cast %100 : vector<8xf32> to vector<8x1xf32>
      %102 = arith.addf %93, %101 : vector<8x1xf32>
      %c3_103 = arith.constant 3 : index
      %c0_104 = arith.constant 0 : index
      %c0_105 = arith.constant 0 : index
      %103 = vector.load %arg7[%c3_103, %c0_104, %c0_105] : memref<4x8x256xf32, #tpu.memory_space<vmem>>, vector<1x8x256xf32>
      %104 = vector.shape_cast %103 : vector<1x8x256xf32> to vector<8x256xf32>
      %cst_106 = arith.constant dense<0.000000e+00> : vector<8xf32>
      %105 = vector.multi_reduction <add>, %104, %cst_106 [1] : vector<8x256xf32> to vector<8xf32>
      %106 = vector.shape_cast %105 : vector<8xf32> to vector<8x1xf32>
      %107 = arith.addf %98, %106 : vector<8x1xf32>
      %108 = arith.mulf %104, %104 : vector<8x256xf32>
      %cst_107 = arith.constant dense<0.000000e+00> : vector<8xf32>
      %109 = vector.multi_reduction <add>, %108, %cst_107 [1] : vector<8x256xf32> to vector<8xf32>
      %110 = vector.shape_cast %109 : vector<8xf32> to vector<8x1xf32>
      %111 = arith.addf %102, %110 : vector<8x1xf32>
      %cst_108 = arith.constant 9.765625E-4 : f32
      %112 = vector.broadcast %cst_108 : f32 to vector<8x1xf32>
      %113 = arith.mulf %107, %112 : vector<8x1xf32>
      %cst_109 = arith.constant 9.765625E-4 : f32
      %114 = vector.broadcast %cst_109 : f32 to vector<8x1xf32>
      %115 = arith.mulf %111, %114 : vector<8x1xf32>
      %116 = arith.mulf %113, %113 : vector<8x1xf32>
      %117 = arith.subf %115, %116 : vector<8x1xf32>
      %cst_110 = arith.constant 0.000000e+00 : f32
      %118 = vector.broadcast %cst_110 : f32 to vector<8x1xf32>
      %119 = arith.maximumf %117, %118 : vector<8x1xf32>
      %cst_111 = arith.constant 9.99999974E-6 : f32
      %120 = vector.broadcast %cst_111 : f32 to vector<8x1xf32>
      %121 = arith.addf %119, %120 : vector<8x1xf32>
      %122 = math.rsqrt %121 : vector<8x1xf32>
      %c0_112 = arith.constant 0 : index
      %c0_113 = arith.constant 0 : index
      %c0_114 = arith.constant 0 : index
      %123 = vector.load %arg7[%c0_112, %c0_113, %c0_114] : memref<4x8x256xf32, #tpu.memory_space<vmem>>, vector<1x8x256xf32>
      %124 = vector.shape_cast %123 : vector<1x8x256xf32> to vector<8x256xf32>
      %125 = vector.broadcast %113 : vector<8x1xf32> to vector<8x256xf32>
      %126 = arith.subf %124, %125 : vector<8x256xf32>
      %127 = vector.broadcast %122 : vector<8x1xf32> to vector<8x256xf32>
      %128 = arith.mulf %126, %127 : vector<8x256xf32>
      %c0_115 = arith.constant 0 : index
      %c0_116 = arith.constant 0 : index
      %c0_117 = arith.constant 0 : index
      %c0_118 = arith.constant 0 : index
      %129 = vector.load %arg6[%c0_115, %c0_116, %c0_117, %c0_118] : memref<1x4x8x256xf32, #tpu.memory_space<vmem>>, vector<1x1x8x256xf32>
      %130 = vector.shape_cast %129 : vector<1x1x8x256xf32> to vector<8x256xf32>
      %131 = vector.shape_cast %128 : vector<8x256xf32> to vector<1x1x8x256xf32>
      tpu.vector_store %arg6[%c0_115, %c0_116, %c0_117, %c0_118], %131 {strides = array<i32>} : memref<1x4x8x256xf32, #tpu.memory_space<vmem>>, vector<1x1x8x256xf32>,
      %c1_119 = arith.constant 1 : index
      %c0_120 = arith.constant 0 : index
      %c0_121 = arith.constant 0 : index
      %132 = vector.load %arg7[%c1_119, %c0_120, %c0_121] : memref<4x8x256xf32, #tpu.memory_space<vmem>>, vector<1x8x256xf32>
      %133 = vector.shape_cast %132 : vector<1x8x256xf32> to vector<8x256xf32>
      %134 = vector.broadcast %113 : vector<8x1xf32> to vector<8x256xf32>
      %135 = arith.subf %133, %134 : vector<8x256xf32>
      %136 = vector.broadcast %122 : vector<8x1xf32> to vector<8x256xf32>
      %137 = arith.mulf %135, %136 : vector<8x256xf32>
      %c0_122 = arith.constant 0 : index
      %c1_123 = arith.constant 1 : index
      %c0_124 = arith.constant 0 : index
      %c0_125 = arith.constant 0 : index
      %138 = vector.load %arg6[%c0_122, %c1_123, %c0_124, %c0_125] : memref<1x4x8x256xf32, #tpu.memory_space<vmem>>, vector<1x1x8x256xf32>
      %139 = vector.shape_cast %138 : vector<1x1x8x256xf32> to vector<8x256xf32>
      %140 = vector.shape_cast %137 : vector<8x256xf32> to vector<1x1x8x256xf32>
      tpu.vector_store %arg6[%c0_122, %c1_123, %c0_124, %c0_125], %140 {strides = array<i32>} : memref<1x4x8x256xf32, #tpu.memory_space<vmem>>, vector<1x1x8x256xf32>,
      %c2_126 = arith.constant 2 : index
      %c0_127 = arith.constant 0 : index
      %c0_128 = arith.constant 0 : index
      %141 = vector.load %arg7[%c2_126, %c0_127, %c0_128] : memref<4x8x256xf32, #tpu.memory_space<vmem>>, vector<1x8x256xf32>
      %142 = vector.shape_cast %141 : vector<1x8x256xf32> to vector<8x256xf32>
      %143 = vector.broadcast %113 : vector<8x1xf32> to vector<8x256xf32>
      %144 = arith.subf %142, %143 : vector<8x256xf32>
      %145 = vector.broadcast %122 : vector<8x1xf32> to vector<8x256xf32>
      %146 = arith.mulf %144, %145 : vector<8x256xf32>
      %c0_129 = arith.constant 0 : index
      %c2_130 = arith.constant 2 : index
      %c0_131 = arith.constant 0 : index
      %c0_132 = arith.constant 0 : index
      %147 = vector.load %arg6[%c0_129, %c2_130, %c0_131, %c0_132] : memref<1x4x8x256xf32, #tpu.memory_space<vmem>>, vector<1x1x8x256xf32>
      %148 = vector.shape_cast %147 : vector<1x1x8x256xf32> to vector<8x256xf32>
      %149 = vector.shape_cast %146 : vector<8x256xf32> to vector<1x1x8x256xf32>
      tpu.vector_store %arg6[%c0_129, %c2_130, %c0_131, %c0_132], %149 {strides = array<i32>} : memref<1x4x8x256xf32, #tpu.memory_space<vmem>>, vector<1x1x8x256xf32>,
      %c3_133 = arith.constant 3 : index
      %c0_134 = arith.constant 0 : index
      %c0_135 = arith.constant 0 : index
      %150 = vector.load %arg7[%c3_133, %c0_134, %c0_135] : memref<4x8x256xf32, #tpu.memory_space<vmem>>, vector<1x8x256xf32>
      %151 = vector.shape_cast %150 : vector<1x8x256xf32> to vector<8x256xf32>
      %152 = vector.broadcast %113 : vector<8x1xf32> to vector<8x256xf32>
      %153 = arith.subf %151, %152 : vector<8x256xf32>
      %154 = vector.broadcast %122 : vector<8x1xf32> to vector<8x256xf32>
      %155 = arith.mulf %153, %154 : vector<8x256xf32>
      %c0_136 = arith.constant 0 : index
      %c3_137 = arith.constant 3 : index
      %c0_138 = arith.constant 0 : index
      %c0_139 = arith.constant 0 : index
      %156 = vector.load %arg6[%c0_136, %c3_137, %c0_138, %c0_139] : memref<1x4x8x256xf32, #tpu.memory_space<vmem>>, vector<1x1x8x256xf32>
      %157 = vector.shape_cast %156 : vector<1x1x8x256xf32> to vector<8x256xf32>
      %158 = vector.shape_cast %155 : vector<8x256xf32> to vector<1x1x8x256xf32>
      tpu.vector_store %arg6[%c0_136, %c3_137, %c0_138, %c0_139], %158 {strides = array<i32>} : memref<1x4x8x256xf32, #tpu.memory_space<vmem>>, vector<1x1x8x256xf32>,
    } else {
    }
    return
  }
  func.func @transform_0(%arg0: i32, %arg1: i32, %arg2: i32) -> (i32, i32, i32, i32) {
    %c0_i32 = arith.constant 0 : i32
    %c0_i32_0 = arith.constant 0 : i32
    %c0_i32_1 = arith.constant 0 : i32
    return %arg0, %c0_i32, %arg2, %c0_i32_0 : i32, i32, i32, i32
  }
  func.func @transform_1(%arg0: i32, %arg1: i32, %arg2: i32) -> (i32, i32, i32) {
    %c0_i32 = arith.constant 0 : i32
    %c0_i32_0 = arith.constant 0 : i32
    return %c0_i32, %arg1, %arg2 : i32, i32, i32
  }
  func.func @transform_2(%arg0: i32, %arg1: i32, %arg2: i32) -> (i32, i32) {
    %c0_i32 = arith.constant 0 : i32
    %c0_i32_0 = arith.constant 0 : i32
    return %arg1, %c0_i32 : i32, i32
  }
  func.func @transform_3(%arg0: i32, %arg1: i32, %arg2: i32) -> (i32, i32, i32, i32) {
    %c0_i32 = arith.constant 0 : i32
    %c0_i32_0 = arith.constant 0 : i32
    %c0_i32_1 = arith.constant 0 : i32
    return %arg0, %c0_i32, %arg1, %c0_i32_0 : i32, i32, i32, i32
  }
}

</mosaic_0001>

<llo_original>
// kernel: deconv_block_forward.1
$region0: #{deconv_block_forward.1}
  #allocation0 [shape = 'u32[]', space=smem, size = 0x4, offset = 0x4, fixed_abs, tag = 'smem constant byte address 0x4 - core index']
  #allocation1 [shape = 'u32[144,128]{1,0:T(1,128)}', space=vmem, size = 0x12000, scoped, tag = 'internal scratch']
  #allocation2 [shape = 'f32[4,8,256]{2,1,0:T(8,128)}', space=vmem, size = 0x8000, scoped, tag = 'scratch operand']
  %s0 = inlined_call_operand.vmem [shape: bf16[2,6,8,256], index: 0, kind: input, shape index: {}]
  %s1 = inlined_call_operand.vmem [shape: bf16[8,8,8], index: 1, kind: input, shape index: {}]
  %s2 = inlined_call_operand.vmem [shape: f32[8,1], index: 2, kind: input, shape index: {}]
  %s3 = inlined_call_operand.vmem [shape: f32[2,4,8,256], index: 3, kind: output, shape index: {}]
  %s4 = sld [smem:[#allocation0]]
  $region53: #{deconv_block_forward.1} parent=0
    _
  %s6 = ssub.s32 1, %s4
  %s7 = scalar_select 0, %s6, %s4
  loop: start=0, step=1, limit=4
  $region2: #{deconv_block_forward.1} parent=0 // loop_pre_header
    _
  $region3: #{deconv_block_forward.1} parent=0 // loop_header
    %s9 = sphi 0, %s13
    %p10 = scmp.ge.s32.totalorder %s9, 4
    %s16 = sphi 0, %s35
    %s17 = sphi 0, %s31
    %s18 = sphi 0, %s27
    %s19 = sphi 0, %s16
    %s20 = sphi 0, %s17
    %s21 = sphi 0, %s18
    %s22 = sphi 0, %s19
    %s23 = sphi 0, %s20
    %s24 = sphi 0, %s21
    %s40 = sphi 0, %s42
    %s43 = sphi 0, %s40
    %s44 = sphi 0, %s43
    %s60 = sphi 0, %s44
    %s68 = sphi 0, %s70
    %s71 = sphi 0, %s68
    %s72 = sphi 0, %s71
    %s88 = sphi 0, %s72
    %s94 = sphi 0, %s96
    %s97 = sphi 0, %s94
    %s98 = sphi 0, %s97
    %s114 = sphi 0, %s98
    %s122 = sphi 0, %s124
    %s125 = sphi 0, %s122
    %s126 = sphi 0, %s125
    %s142 = sphi 0, %s126
  $region4: #{deconv_block_forward.1} parent=0 // loop_header_branch
    %12 = sbr.rel (%p10) target = $region8
  $region5: #{deconv_block_forward.1} parent=0 // loop_body
    %s14 = ssub.s32 %s9, 1
    %s15 = ssub.s32 %s9, 2
    %s25 = sadd.s32 1, %s18
    %p26 = scmp.ge.s32.totalorder %s25, 1
    %s27 = scalar_select %p26, 0, %s25
    %s28 = sadd.s32 1, %s17
    %s29 = scalar_select %p26, %s28, %s17
    %p30 = scmp.ge.s32.totalorder %s29, 1
    %s31 = scalar_select %p30, 0, %s29
    %s32 = sadd.s32 1, %s16
    %s33 = scalar_select %p30, %s32, %s16
    %p34 = scmp.ge.s32.totalorder %s33, 2
    %s35 = scalar_select %p34, 0, %s33
    %s36 = ssub.s32 %s16, %s35
    %s37 = ssub.s32 %s18, %s27
    %s38 = sor.u32 %s36, %s37
    %p39 = scmp.eq.s32.totalorder %s38, 0
    %s41 = sadd.s32 %s40, 1
    %s42 = scalar_select %p39, %s40, %s41
    %p45 = pneg %p39
    %p46 = scmp.eq.s32.totalorder %s9, 1
    %p47 = por %p45, %p46
    %p48 = scmp.ne.s32.totalorder %s40, %s43
    %p49 = scmp.eq.s32.totalorder %s9, 0
    %p50 = por %p48, %p49
    %p51 = scmp.ne.s32.totalorder %s40, %s43
    %p52 = scmp.eq.s32.totalorder %s14, 1
    %p53 = por %p51, %p52
    %p54 = scmp.ne.s32.totalorder %s43, %s44
    %p55 = scmp.eq.s32.totalorder %s14, 0
    %p56 = por %p54, %p55
    %p57 = scmp.ne.s32.totalorder %s43, %s44
    %p58 = scmp.eq.s32.totalorder %s15, 1
    %p59 = por %p57, %p58
    %p61 = scmp.ne.s32.totalorder %s44, %s60
    %p62 = scmp.eq.s32.totalorder %s15, 0
    %p63 = por %p61, %p62
    %s64 = ssub.s32 %s17, %s31
    %s65 = ssub.s32 %s18, %s27
    %s66 = sor.u32 %s64, %s65
    %p67 = scmp.eq.s32.totalorder %s66, 0
    %s69 = sadd.s32 %s68, 1
    %s70 = scalar_select %p67, %s68, %s69
    %p73 = pneg %p67
    %p74 = scmp.eq.s32.totalorder %s9, 1
    %p75 = por %p73, %p74
    %p76 = scmp.ne.s32.totalorder %s68, %s71
    %p77 = scmp.eq.s32.totalorder %s9, 0
    %p78 = por %p76, %p77
    %p79 = scmp.ne.s32.totalorder %s68, %s71
    %p80 = scmp.eq.s32.totalorder %s14, 1
    %p81 = por %p79, %p80
    %p82 = scmp.ne.s32.totalorder %s71, %s72
    %p83 = scmp.eq.s32.totalorder %s14, 0
    %p84 = por %p82, %p83
    %p85 = scmp.ne.s32.totalorder %s71, %s72
    %p86 = scmp.eq.s32.totalorder %s15, 1
    %p87 = por %p85, %p86
    %p89 = scmp.ne.s32.totalorder %s72, %s88
    %p90 = scmp.eq.s32.totalorder %s15, 0
    %p91 = por %p89, %p90
    %s92 = ssub.s32 %s17, %s31
    %p93 = scmp.eq.s32.totalorder %s92, 0
    %s95 = sadd.s32 %s94, 1
    %s96 = scalar_select %p93, %s94, %s95
    %p99 = pneg %p93
    %p100 = scmp.eq.s32.totalorder %s9, 1
    %p101 = por %p99, %p100
    %p102 = scmp.ne.s32.totalorder %s94, %s97
    %p103 = scmp.eq.s32.totalorder %s9, 0
    %p104 = por %p102, %p103
    %p105 = scmp.ne.s32.totalorder %s94, %s97
    %p106 = scmp.eq.s32.totalorder %s14, 1
    %p107 = por %p105, %p106
    %p108 = scmp.ne.s32.totalorder %s97, %s98
    %p109 = scmp.eq.s32.totalorder %s14, 0
    %p110 = por %p108, %p109
    %p111 = scmp.ne.s32.totalorder %s97, %s98
    %p112 = scmp.eq.s32.totalorder %s15, 1
    %p113 = por %p111, %p112
    %p115 = scmp.ne.s32.totalorder %s98, %s114
    %p116 = scmp.eq.s32.totalorder %s15, 0
    %p117 = por %p115, %p116
    %s118 = ssub.s32 %s16, %s35
    %s119 = ssub.s32 %s17, %s31
    %s120 = sor.u32 %s118, %s119
    %p121 = scmp.eq.s32.totalorder %s120, 0
    %s123 = sadd.s32 %s122, 1
    %s124 = scalar_select %p121, %s122, %s123
    %p127 = pneg %p121
    %p128 = scmp.eq.s32.totalorder %s9, 1
    %p129 = por %p127, %p128
    %p130 = scmp.ne.s32.totalorder %s122, %s125
    %p131 = scmp.eq.s32.totalorder %s9, 0
    %p132 = por %p130, %p131
    %p133 = scmp.ne.s32.totalorder %s122, %s125
    %p134 = scmp.eq.s32.totalorder %s14, 1
    %p135 = por %p133, %p134
    %p136 = scmp.ne.s32.totalorder %s125, %s126
    %p137 = scmp.eq.s32.totalorder %s14, 0
    %p138 = por %p136, %p137
    %p139 = scmp.ne.s32.totalorder %s125, %s126
    %p140 = scmp.eq.s32.totalorder %s15, 1
    %p141 = por %p139, %p140
    %p143 = scmp.ne.s32.totalorder %s126, %s142
    %p144 = scmp.eq.s32.totalorder %s15, 0
    %p145 = por %p143, %p144
    %p146 = scmp.le.s32.totalorder 1, %s9
    %p147 = scmp.lt.s32.totalorder %s9, 3
    %p148 = pnand %p146, %p147
    %p149 = pneg %p148
    // Predicated region
    $region9: #{deconv_block_forward.1} parent=5 // pred_check
      _
    $region10: #{deconv_block_forward.1} parent=5 // pred_check_branch
      %151 = sbr.rel (%p148) target = $region12
    $region11: #{deconv_block_forward.1} parent=5 // pred_region
      %s152 = ssub.s32 %s9, 1
      // Predicated region
      $region13: #{deconv_block_forward.1} parent=11 // pred_check
        %p153 = pneg %p84
      $region14: #{deconv_block_forward.1} parent=11 // pred_check_branch
        %155 = sbr.rel (%p153) target = $region16
      $region15: #{deconv_block_forward.1} parent=11 // pred_region
        %p156 = scmp.lt.s32.totalorder %s20, 0
        %s157 = scalar_select %p156, %s20, 0
        %p158 = scmp.lt.s32.totalorder %s21, 0
        %s159 = scalar_select %p158, %s21, 0
        %s160 = sadd.s32 %s159, %s157
        %s161 = smul.addr %s160, 4
        %s162 = scalar_lea.vmem %s1, %s161
      $region16: #{deconv_block_forward.1} parent=11 // pred_fallthru
        _
      // Predicated region
      $region17: #{deconv_block_forward.1} parent=11 // pred_check
        %p163 = pneg %p110
      $region18: #{deconv_block_forward.1} parent=11 // pred_check_branch
        %165 = sbr.rel (%p163) target = $region20
      $region19: #{deconv_block_forward.1} parent=11 // pred_region
        %p166 = scmp.lt.s32.totalorder %s20, 0
        %s167 = scalar_select %p166, %s20, 0
        %s168 = smul.addr %s167, 8
        %s169 = scalar_lea.vmem %s2, %s168
      $region20: #{deconv_block_forward.1} parent=11 // pred_fallthru
        _
    $region12: #{deconv_block_forward.1} parent=5 // pred_fallthru
      _
    %p170 = scmp.lt.s32.totalorder %s9, 2
    // Predicated region
    $region21: #{deconv_block_forward.1} parent=5 // pred_check
      %p171 = pneg %p170
    $region22: #{deconv_block_forward.1} parent=5 // pred_check_branch
      %173 = sbr.rel (%p171) target = $region24
    $region23: #{deconv_block_forward.1} parent=5 // pred_region
      // Predicated region
      $region25: #{deconv_block_forward.1} parent=23 // pred_check
        %p174 = pneg %p50
      $region26: #{deconv_block_forward.1} parent=23 // pred_check_branch
        %176 = sbr.rel (%p174) target = $region28
      $region27: #{deconv_block_forward.1} parent=23 // pred_region
        %p177 = scmp.lt.s32.totalorder %s16, 1
        %s178 = scalar_select %p177, %s16, 1
        %p179 = scmp.lt.s32.totalorder %s18, 0
        %s180 = scalar_select %p179, %s18, 0
        %s181 = smul.addr %s180, 2
        %s182 = smul.addr %s178, 12
        %s183 = sadd.s32 %s181, %s182
        %s184 = smul.addr %s183, 4
        %s185 = scalar_lea.vmem %s0, %s184
      $region28: #{deconv_block_forward.1} parent=23 // pred_fallthru
        _
    $region24: #{deconv_block_forward.1} parent=5 // pred_fallthru
      _
    %p186 = scmp.le.s32.totalorder 1, %s9
    %p187 = scmp.lt.s32.totalorder %s9, 3
    %p188 = pnand %p186, %p187
    %p189 = pneg %p188
    // Predicated region
    $region29: #{deconv_block_forward.1} parent=5 // pred_check
      _
    $region30: #{deconv_block_forward.1} parent=5 // pred_check_branch
      %191 = sbr.rel (%p188) target = $region32
    $region31: #{deconv_block_forward.1} parent=5 // pred_region
      %s192 = ssub.s32 %s9, 1
      %p193 = scmp.lt.s32.totalorder %s19, 1
      %s194 = scalar_select %p193, %s19, 1
      %p195 = scmp.lt.s32.totalorder %s21, 0
      %s196 = scalar_select %p195, %s21, 0
      %s197 = smul.addr %s196, 2
      %s198 = smul.addr %s194, 12
      %s199 = sadd.s32 %s197, %s198
      %s200 = smul.addr %s199, 4
      %s201 = scalar_lea.vmem %s0, %s200
      %p202 = pneg %p56
      %p203 = pneg %p53
      %p204 = scmp.lt.s32.totalorder %s20, 0
      %s205 = scalar_select %p204, %s20, 0
      %p206 = scmp.lt.s32.totalorder %s21, 0
      %s207 = scalar_select %p206, %s21, 0
      %s208 = sadd.s32 %s207, %s205
      %s209 = smul.addr %s208, 4
      %s210 = scalar_lea.vmem %s1, %s209
      %p211 = pneg %p84
      %p212 = pneg %p81
      %p213 = scmp.lt.s32.totalorder %s20, 0
      %s214 = scalar_select %p213, %s20, 0
      %s215 = smul.addr %s214, 8
      %s216 = scalar_lea.vmem %s2, %s215
      %p217 = pneg %p110
      %p218 = pneg %p107
      %p219 = pneg %p138
      %p220 = pneg %p135
      %p221 = scmp.lt.s32.totalorder %s19, 1
      %s222 = scalar_select %p221, %s19, 1
      %p223 = scmp.lt.s32.totalorder %s20, 0
      %s224 = scalar_select %p223, %s20, 0
      %s225 = smul.addr %s224, 2
      %s226 = smul.addr %s222, 8
      %s227 = sadd.s32 %s225, %s226
      %s228 = smul.addr %s227, 8
      %s229 = scalar_lea.vmem %s3, %s228
      %p230 = scmp.lt.s32.totalorder %s19, 1
      %s231 = scalar_select %p230, %s19, 1
      %p232 = scmp.lt.s32.totalorder %s21, 0
      %s233 = scalar_select %p232, %s21, 0
      %s234 = smul.addr %s233, 2
      %s235 = smul.addr %s231, 12
      %s236 = sadd.s32 %s234, %s235
      %s237 = smul.addr %s236, 4
      %s238 = scalar_lea.vmem %s0, %s237
      %p239 = scmp.lt.s32.totalorder %s20, 0
      %s240 = scalar_select %p239, %s20, 0
      %p241 = scmp.lt.s32.totalorder %s21, 0
      %s242 = scalar_select %p241, %s21, 0
      %s243 = sadd.s32 %s242, %s240
      %s244 = smul.addr %s243, 4
      %s245 = scalar_lea.vmem %s1, %s244
      %p246 = scmp.lt.s32.totalorder %s20, 0
      %s247 = scalar_select %p246, %s20, 0
      %s248 = smul.addr %s247, 8
      %s249 = scalar_lea.vmem %s2, %s248
      %p250 = scmp.lt.s32.totalorder %s19, 1
      %s251 = scalar_select %p250, %s19, 1
      %p252 = scmp.lt.s32.totalorder %s20, 0
      %s253 = scalar_select %p252, %s20, 0
      %s254 = smul.addr %s253, 2
      %s255 = smul.addr %s251, 8
      %s256 = sadd.s32 %s254, %s255
      %s257 = smul.addr %s256, 8
      %s258 = scalar_lea.vmem %s3, %s257
      %p260 = scmp.eq.s32.totalorder %s21, 0
      // Predicated region
      $region33: #{deconv_block_forward.1} parent=31 // pred_check
        %p261 = pneg %p260
      $region34: #{deconv_block_forward.1} parent=31 // pred_check_branch
        %263 = sbr.rel (%p261) target = $region36
      $region35: #{deconv_block_forward.1} parent=31 // pred_region
        %v264 = vld [vmem:[%s249] sm:$0xff]
        %266 = vset.pattern.permute.xlu0 0
        %267 = vperm.xlu0 %266, %v264
        %v268 = vpop.permute.xlu0 %267
        %270 = vst [vmem:[#allocation2] sm:$0xff] %v268
        %271 = vst [vmem:[#allocation2 + $0x8] sm:$0xff] %v268
        %272 = vst [vmem:[#allocation2 + $0x10] sm:$0xff] %v268
        %273 = vst [vmem:[#allocation2 + $0x18] sm:$0xff] %v268
        %274 = vst [vmem:[#allocation2 + $0x20] sm:$0xff] %v268
        %275 = vst [vmem:[#allocation2 + $0x28] sm:$0xff] %v268
        %276 = vst [vmem:[#allocation2 + $0x30] sm:$0xff] %v268
        %277 = vst [vmem:[#allocation2 + $0x38] sm:$0xff] %v268
      $region36: #{deconv_block_forward.1} parent=31 // pred_fallthru
        _
      %v278 = vld [vmem:[#allocation2] sm:$0xff]
      %v279 = vld [vmem:[#allocation2 + $0x8] sm:$0xff]
      %v280 = vld [vmem:[%s245] sm:$0xf]
      %v281 = vld [vmem:[%s238] sm:$0xff]
      %v283 = vunpack.c.l.b16 %v281
      %v284 = vunpack.c.h.b16 %v281
      %v285 = vpack.c.b16 %v283, %v283
      %v286 = vpack.c.b16 %v284, %v284
      %vm287 = vcmask 64512
      %v289 = vsel %vm287, %v280, 0
      %vm291 = vcmask 1043456
      %v293 = vsel %vm291, %v285, 0
      %v296 = vsel %vm291, %v286, 0
      %298 = vmatprep.subr.bf16.mxu0 %v296
      %299 = vmatpush1.bf16.msra.mxu0 %v293
      %300 = vmatprep.subr.bf16.mxu0 0
      %301 = vmatpush1.bf16.msra.mxu0 0
      %302 = vmatprep.subr.bf16.mxu0 0
      %303 = vmatpush1.bf16.msra.mxu0 0
      %304 = vmatprep.subr.bf16.mxu0 0
      %305 = vmatpush1.bf16.msra.mxu0 0
      %306 = vmatprep.subr.bf16.mxu0 0
      %307 = vmatpush1.bf16.msra.mxu0 0
      %308 = vmatprep.subr.bf16.mxu0 0
      %309 = vmatpush1.bf16.msra.mxu0 0
      %310 = vmatprep.subr.bf16.mxu0 0
      %311 = vmatpush1.bf16.msra.mxu0 0
      %312 = vmatprep.subr.bf16.mxu0 0
      %313 = vmatpush1.bf16.msra.mxu0 0
      %314 = vmatprep.subr.bf16.mxu0 0
      %315 = vmatpush1.bf16.msra.mxu0 0
      %316 = vmatprep.subr.bf16.mxu0 0
      %317 = vmatpush1.bf16.msra.mxu0 0
      %318 = vmatprep.subr.bf16.mxu0 0
      %319 = vmatpush1.bf16.msra.mxu0 0
      %320 = vmatprep.subr.bf16.mxu0 0
      %321 = vmatpush1.bf16.msra.mxu0 0
      %322 = vmatprep.subr.bf16.mxu0 0
      %323 = vmatpush1.bf16.msra.mxu0 0
      %324 = vmatprep.subr.bf16.mxu0 0
      %325 = vmatpush1.bf16.msra.mxu0 0
      %326 = vmatprep.subr.bf16.mxu0 0
      %327 = vmatpush1.bf16.msra.mxu0 0
      %328 = vmatprep.subr.bf16.mxu0 0
      %329 = vmatpush1.bf16.msra.mxu0 0
      %330 = vmatprep.mubr.bf16.mxu0 0
      %331 = vmatmul.mubr.bf16.gmra.mrb[0].mxu0 %v289
      %v332 = vpop.f32.mrb[0].mxu0
      %v333 = vadd.f32 0.0, %v332
      %v334 = vpop.f32.mrb[0].mxu0
      %v335 = vadd.f32 0.0, %v334
      %v336 = vpop.f32.mrb[0].mxu0
      %v337 = vpop.f32.mrb[0].mxu0
      %338 = vdwg.mxu0
      %v339 = vadd.f32 %v278, %v333
      %v340 = vadd.f32 %v279, %v335
      %s341 = scalar_lea.vmem %s245, 4
      %v342 = vld [vmem:[%s341] sm:$0xf]
      %s343 = scalar_lea.vmem %s238, 16
      %v344 = vld [vmem:[%s343] sm:$0xff]
      %v346 = vunpack.c.l.b16 %v344
      %v347 = vunpack.c.h.b16 %v344
      %v348 = vpack.c.b16 %v346, %v346
      %v349 = vpack.c.b16 %v347, %v347
      %v351 = vsel %vm287, %v342, 0
      %v354 = vsel %vm291, %v348, 0
      %v357 = vsel %vm291, %v349, 0
      %359 = vmatprep.subr.bf16.mxu0 %v357
      %360 = vmatpush1.bf16.msra.mxu0 %v354
      %361 = vmatprep.subr.bf16.mxu0 0
      %362 = vmatpush1.bf16.msra.mxu0 0
      %363 = vmatprep.subr.bf16.mxu0 0
      %364 = vmatpush1.bf16.msra.mxu0 0
      %365 = vmatprep.subr.bf16.mxu0 0
      %366 = vmatpush1.bf16.msra.mxu0 0
      %367 = vmatprep.subr.bf16.mxu0 0
      %368 = vmatpush1.bf16.msra.mxu0 0
      %369 = vmatprep.subr.bf16.mxu0 0
      %370 = vmatpush1.bf16.msra.mxu0 0
      %371 = vmatprep.subr.bf16.mxu0 0
      %372 = vmatpush1.bf16.msra.mxu0 0
      %373 = vmatprep.subr.bf16.mxu0 0
      %374 = vmatpush1.bf16.msra.mxu0 0
      %375 = vmatprep.subr.bf16.mxu0 0
      %376 = vmatpush1.bf16.msra.mxu0 0
      %377 = vmatprep.subr.bf16.mxu0 0
      %378 = vmatpush1.bf16.msra.mxu0 0
      %379 = vmatprep.subr.bf16.mxu0 0
      %380 = vmatpush1.bf16.msra.mxu0 0
      %381 = vmatprep.subr.bf16.mxu0 0
      %382 = vmatpush1.bf16.msra.mxu0 0
      %383 = vmatprep.subr.bf16.mxu0 0
      %384 = vmatpush1.bf16.msra.mxu0 0
      %385 = vmatprep.subr.bf16.mxu0 0
      %386 = vmatpush1.bf16.msra.mxu0 0
      %387 = vmatprep.subr.bf16.mxu0 0
      %388 = vmatpush1.bf16.msra.mxu0 0
      %389 = vmatprep.subr.bf16.mxu0 0
      %390 = vmatpush1.bf16.msra.mxu0 0
      %391 = vmatprep.mubr.bf16.mxu0 0
      %392 = vmatmul.mubr.bf16.gmra.mrb[0].mxu0 %v351
      %v393 = vpop.f32.mrb[0].mxu0
      %v394 = vadd.f32 0.0, %v393
      %v395 = vpop.f32.mrb[0].mxu0
      %v396 = vadd.f32 0.0, %v395
      %v397 = vpop.f32.mrb[0].mxu0
      %v398 = vpop.f32.mrb[0].mxu0
      %399 = vdwg.mxu0
      %v400 = vadd.f32 %v339, %v394
      %v401 = vadd.f32 %v340, %v396
      %402 = vst [vmem:[#allocation2] sm:$0xff] %v400
      %403 = vst [vmem:[#allocation2 + $0x8] sm:$0xff] %v401
      %s404 = scalar_lea.vmem [#allocation2], 16
      %v405 = vld [vmem:[%s404] sm:$0xff]
      %v406 = vld [vmem:[%s404 + $0x8] sm:$0xff]
      %s407 = scalar_lea.vmem %s245, 8
      %v408 = vld [vmem:[%s407] sm:$0xf]
      %s409 = scalar_lea.vmem %s238, 8
      %v410 = vld [vmem:[%s409] sm:$0xff]
      %v412 = vunpack.c.l.b16 %v410
      %v413 = vunpack.c.h.b16 %v410
      %v414 = vpack.c.b16 %v412, %v412
      %v415 = vpack.c.b16 %v413, %v413
      %v417 = vsel %vm287, %v408, 0
      %v420 = vsel %vm291, %v414, 0
      %v423 = vsel %vm291, %v415, 0
      %425 = vmatprep.subr.bf16.mxu0 %v423
      %426 = vmatpush1.bf16.msra.mxu0 %v420
      %427 = vmatprep.subr.bf16.mxu0 0
      %428 = vmatpush1.bf16.msra.mxu0 0
      %429 = vmatprep.subr.bf16.mxu0 0
      %430 = vmatpush1.bf16.msra.mxu0 0
      %431 = vmatprep.subr.bf16.mxu0 0
      %432 = vmatpush1.bf16.msra.mxu0 0
      %433 = vmatprep.subr.bf16.mxu0 0
      %434 = vmatpush1.bf16.msra.mxu0 0
      %435 = vmatprep.subr.bf16.mxu0 0
      %436 = vmatpush1.bf16.msra.mxu0 0
      %437 = vmatprep.subr.bf16.mxu0 0
      %438 = vmatpush1.bf16.msra.mxu0 0
      %439 = vmatprep.subr.bf16.mxu0 0
      %440 = vmatpush1.bf16.msra.mxu0 0
      %441 = vmatprep.subr.bf16.mxu0 0
      %442 = vmatpush1.bf16.msra.mxu0 0
      %443 = vmatprep.subr.bf16.mxu0 0
      %444 = vmatpush1.bf16.msra.mxu0 0
      %445 = vmatprep.subr.bf16.mxu0 0
      %446 = vmatpush1.bf16.msra.mxu0 0
      %447 = vmatprep.subr.bf16.mxu0 0
      %448 = vmatpush1.bf16.msra.mxu0 0
      %449 = vmatprep.subr.bf16.mxu0 0
      %450 = vmatpush1.bf16.msra.mxu0 0
      %451 = vmatprep.subr.bf16.mxu0 0
      %452 = vmatpush1.bf16.msra.mxu0 0
      %453 = vmatprep.subr.bf16.mxu0 0
      %454 = vmatpush1.bf16.msra.mxu0 0
      %455 = vmatprep.subr.bf16.mxu0 0
      %456 = vmatpush1.bf16.msra.mxu0 0
      %457 = vmatprep.mubr.bf16.mxu0 0
      %458 = vmatmul.mubr.bf16.gmra.mrb[0].mxu0 %v417
      %v459 = vpop.f32.mrb[0].mxu0
      %v460 = vadd.f32 0.0, %v459
      %v461 = vpop.f32.mrb[0].mxu0
      %v462 = vadd.f32 0.0, %v461
      %v463 = vpop.f32.mrb[0].mxu0
      %v464 = vpop.f32.mrb[0].mxu0
      %465 = vdwg.mxu0
      %v466 = vadd.f32 %v405, %v460
      %v467 = vadd.f32 %v406, %v462
      %s468 = scalar_lea.vmem %s245, 12
      %v469 = vld [vmem:[%s468] sm:$0xf]
      %s470 = scalar_lea.vmem %s238, 24
      %v471 = vld [vmem:[%s470] sm:$0xff]
      %v473 = vunpack.c.l.b16 %v471
      %v474 = vunpack.c.h.b16 %v471
      %v475 = vpack.c.b16 %v473, %v473
      %v476 = vpack.c.b16 %v474, %v474
      %v478 = vsel %vm287, %v469, 0
      %v481 = vsel %vm291, %v475, 0
      %v484 = vsel %vm291, %v476, 0
      %486 = vmatprep.subr.bf16.mxu0 %v484
      %487 = vmatpush1.bf16.msra.mxu0 %v481
      %488 = vmatprep.subr.bf16.mxu0 0
      %489 = vmatpush1.bf16.msra.mxu0 0
      %490 = vmatprep.subr.bf16.mxu0 0
      %491 = vmatpush1.bf16.msra.mxu0 0
      %492 = vmatprep.subr.bf16.mxu0 0
      %493 = vmatpush1.bf16.msra.mxu0 0
      %494 = vmatprep.subr.bf16.mxu0 0
      %495 = vmatpush1.bf16.msra.mxu0 0
      %496 = vmatprep.subr.bf16.mxu0 0
      %497 = vmatpush1.bf16.msra.mxu0 0
      %498 = vmatprep.subr.bf16.mxu0 0
      %499 = vmatpush1.bf16.msra.mxu0 0
      %500 = vmatprep.subr.bf16.mxu0 0
      %501 = vmatpush1.bf16.msra.mxu0 0
      %502 = vmatprep.subr.bf16.mxu0 0
      %503 = vmatpush1.bf16.msra.mxu0 0
      %504 = vmatprep.subr.bf16.mxu0 0
      %505 = vmatpush1.bf16.msra.mxu0 0
      %506 = vmatprep.subr.bf16.mxu0 0
      %507 = vmatpush1.bf16.msra.mxu0 0
      %508 = vmatprep.subr.bf16.mxu0 0
      %509 = vmatpush1.bf16.msra.mxu0 0
      %510 = vmatprep.subr.bf16.mxu0 0
      %511 = vmatpush1.bf16.msra.mxu0 0
      %512 = vmatprep.subr.bf16.mxu0 0
      %513 = vmatpush1.bf16.msra.mxu0 0
      %514 = vmatprep.subr.bf16.mxu0 0
      %515 = vmatpush1.bf16.msra.mxu0 0
      %516 = vmatprep.subr.bf16.mxu0 0
      %517 = vmatpush1.bf16.msra.mxu0 0
      %518 = vmatprep.mubr.bf16.mxu0 0
      %519 = vmatmul.mubr.bf16.gmra.mrb[0].mxu0 %v478
      %v520 = vpop.f32.mrb[0].mxu0
      %v521 = vadd.f32 0.0, %v520
      %v522 = vpop.f32.mrb[0].mxu0
      %v523 = vadd.f32 0.0, %v522
      %v524 = vpop.f32.mrb[0].mxu0
      %v525 = vpop.f32.mrb[0].mxu0
      %526 = vdwg.mxu0
      %v527 = vadd.f32 %v466, %v521
      %v528 = vadd.f32 %v467, %v523
      %529 = vst [vmem:[%s404] sm:$0xff] %v527
      %530 = vst [vmem:[%s404 + $0x8] sm:$0xff] %v528
      %s531 = scalar_lea.vmem [#allocation2], 32
      %v532 = vld [vmem:[%s531] sm:$0xff]
      %v533 = vld [vmem:[%s531 + $0x8] sm:$0xff]
      %s534 = scalar_lea.vmem %s245, 16
      %v535 = vld [vmem:[%s534] sm:$0xf]
      %v536 = vld [vmem:[%s343] sm:$0xff]
      %v538 = vunpack.c.l.b16 %v536
      %v539 = vunpack.c.h.b16 %v536
      %v540 = vpack.c.b16 %v538, %v538
      %v541 = vpack.c.b16 %v539, %v539
      %v543 = vsel %vm287, %v535, 0
      %v546 = vsel %vm291, %v540, 0
      %v549 = vsel %vm291, %v541, 0
      %551 = vmatprep.subr.bf16.mxu0 %v549
      %552 = vmatpush1.bf16.msra.mxu0 %v546
      %553 = vmatprep.subr.bf16.mxu0 0
      %554 = vmatpush1.bf16.msra.mxu0 0
      %555 = vmatprep.subr.bf16.mxu0 0
      %556 = vmatpush1.bf16.msra.mxu0 0
      %557 = vmatprep.subr.bf16.mxu0 0
      %558 = vmatpush1.bf16.msra.mxu0 0
      %559 = vmatprep.subr.bf16.mxu0 0
      %560 = vmatpush1.bf16.msra.mxu0 0
      %561 = vmatprep.subr.bf16.mxu0 0
      %562 = vmatpush1.bf16.msra.mxu0 0
      %563 = vmatprep.subr.bf16.mxu0 0
      %564 = vmatpush1.bf16.msra.mxu0 0
      %565 = vmatprep.subr.bf16.mxu0 0
      %566 = vmatpush1.bf16.msra.mxu0 0
      %567 = vmatprep.subr.bf16.mxu0 0
      %568 = vmatpush1.bf16.msra.mxu0 0
      %569 = vmatprep.subr.bf16.mxu0 0
      %570 = vmatpush1.bf16.msra.mxu0 0
      %571 = vmatprep.subr.bf16.mxu0 0
      %572 = vmatpush1.bf16.msra.mxu0 0
      %573 = vmatprep.subr.bf16.mxu0 0
      %574 = vmatpush1.bf16.msra.mxu0 0
      %575 = vmatprep.subr.bf16.mxu0 0
      %576 = vmatpush1.bf16.msra.mxu0 0
      %577 = vmatprep.subr.bf16.mxu0 0
      %578 = vmatpush1.bf16.msra.mxu0 0
      %579 = vmatprep.subr.bf16.mxu0 0
      %580 = vmatpush1.bf16.msra.mxu0 0
      %581 = vmatprep.subr.bf16.mxu0 0
      %582 = vmatpush1.bf16.msra.mxu0 0
      %583 = vmatprep.mubr.bf16.mxu0 0
      %584 = vmatmul.mubr.bf16.gmra.mrb[0].mxu0 %v543
      %v585 = vpop.f32.mrb[0].mxu0
      %v586 = vadd.f32 0.0, %v585
      %v587 = vpop.f32.mrb[0].mxu0
      %v588 = vadd.f32 0.0, %v587
      %v589 = vpop.f32.mrb[0].mxu0
      %v590 = vpop.f32.mrb[0].mxu0
      %591 = vdwg.mxu0
      %v592 = vadd.f32 %v532, %v586
      %v593 = vadd.f32 %v533, %v588
      %s594 = scalar_lea.vmem %s245, 20
      %v595 = vld [vmem:[%s594] sm:$0xf]
      %s596 = scalar_lea.vmem %s238, 32
      %v597 = vld [vmem:[%s596] sm:$0xff]
      %v599 = vunpack.c.l.b16 %v597
      %v600 = vunpack.c.h.b16 %v597
      %v601 = vpack.c.b16 %v599, %v599
      %v602 = vpack.c.b16 %v600, %v600
      %v604 = vsel %vm287, %v595, 0
      %v607 = vsel %vm291, %v601, 0
      %v610 = vsel %vm291, %v602, 0
      %612 = vmatprep.subr.bf16.mxu0 %v610
      %613 = vmatpush1.bf16.msra.mxu0 %v607
      %614 = vmatprep.subr.bf16.mxu0 0
      %615 = vmatpush1.bf16.msra.mxu0 0
      %616 = vmatprep.subr.bf16.mxu0 0
      %617 = vmatpush1.bf16.msra.mxu0 0
      %618 = vmatprep.subr.bf16.mxu0 0
      %619 = vmatpush1.bf16.msra.mxu0 0
      %620 = vmatprep.subr.bf16.mxu0 0
      %621 = vmatpush1.bf16.msra.mxu0 0
      %622 = vmatprep.subr.bf16.mxu0 0
      %623 = vmatpush1.bf16.msra.mxu0 0
      %624 = vmatprep.subr.bf16.mxu0 0
      %625 = vmatpush1.bf16.msra.mxu0 0
      %626 = vmatprep.subr.bf16.mxu0 0
      %627 = vmatpush1.bf16.msra.mxu0 0
      %628 = vmatprep.subr.bf16.mxu0 0
      %629 = vmatpush1.bf16.msra.mxu0 0
      %630 = vmatprep.subr.bf16.mxu0 0
      %631 = vmatpush1.bf16.msra.mxu0 0
      %632 = vmatprep.subr.bf16.mxu0 0
      %633 = vmatpush1.bf16.msra.mxu0 0
      %634 = vmatprep.subr.bf16.mxu0 0
      %635 = vmatpush1.bf16.msra.mxu0 0
      %636 = vmatprep.subr.bf16.mxu0 0
      %637 = vmatpush1.bf16.msra.mxu0 0
      %638 = vmatprep.subr.bf16.mxu0 0
      %639 = vmatpush1.bf16.msra.mxu0 0
      %640 = vmatprep.subr.bf16.mxu0 0
      %641 = vmatpush1.bf16.msra.mxu0 0
      %642 = vmatprep.subr.bf16.mxu0 0
      %643 = vmatpush1.bf16.msra.mxu0 0
      %644 = vmatprep.mubr.bf16.mxu0 0
      %645 = vmatmul.mubr.bf16.gmra.mrb[0].mxu0 %v604
      %v646 = vpop.f32.mrb[0].mxu0
      %v647 = vadd.f32 0.0, %v646
      %v648 = vpop.f32.mrb[0].mxu0
      %v649 = vadd.f32 0.0, %v648
      %v650 = vpop.f32.mrb[0].mxu0
      %v651 = vpop.f32.mrb[0].mxu0
      %652 = vdwg.mxu0
      %v653 = vadd.f32 %v592, %v647
      %v654 = vadd.f32 %v593, %v649
      %655 = vst [vmem:[%s531] sm:$0xff] %v653
      %656 = vst [vmem:[%s531 + $0x8] sm:$0xff] %v654
      %s657 = scalar_lea.vmem [#allocation2], 48
      %v658 = vld [vmem:[%s657] sm:$0xff]
      %v659 = vld [vmem:[%s657 + $0x8] sm:$0xff]
      %s660 = scalar_lea.vmem %s245, 24
      %v661 = vld [vmem:[%s660] sm:$0xf]
      %v662 = vld [vmem:[%s470] sm:$0xff]
      %v664 = vunpack.c.l.b16 %v662
      %v665 = vunpack.c.h.b16 %v662
      %v666 = vpack.c.b16 %v664, %v664
      %v667 = vpack.c.b16 %v665, %v665
      %v669 = vsel %vm287, %v661, 0
      %v672 = vsel %vm291, %v666, 0
      %v675 = vsel %vm291, %v667, 0
      %677 = vmatprep.subr.bf16.mxu0 %v675
      %678 = vmatpush1.bf16.msra.mxu0 %v672
      %679 = vmatprep.subr.bf16.mxu0 0
      %680 = vmatpush1.bf16.msra.mxu0 0
      %681 = vmatprep.subr.bf16.mxu0 0
      %682 = vmatpush1.bf16.msra.mxu0 0
      %683 = vmatprep.subr.bf16.mxu0 0
      %684 = vmatpush1.bf16.msra.mxu0 0
      %685 = vmatprep.subr.bf16.mxu0 0
      %686 = vmatpush1.bf16.msra.mxu0 0
      %687 = vmatprep.subr.bf16.mxu0 0
      %688 = vmatpush1.bf16.msra.mxu0 0
      %689 = vmatprep.subr.bf16.mxu0 0
      %690 = vmatpush1.bf16.msra.mxu0 0
      %691 = vmatprep.subr.bf16.mxu0 0
      %692 = vmatpush1.bf16.msra.mxu0 0
      %693 = vmatprep.subr.bf16.mxu0 0
      %694 = vmatpush1.bf16.msra.mxu0 0
      %695 = vmatprep.subr.bf16.mxu0 0
      %696 = vmatpush1.bf16.msra.mxu0 0
      %697 = vmatprep.subr.bf16.mxu0 0
      %698 = vmatpush1.bf16.msra.mxu0 0
      %699 = vmatprep.subr.bf16.mxu0 0
      %700 = vmatpush1.bf16.msra.mxu0 0
      %701 = vmatprep.subr.bf16.mxu0 0
      %702 = vmatpush1.bf16.msra.mxu0 0
      %703 = vmatprep.subr.bf16.mxu0 0
      %704 = vmatpush1.bf16.msra.mxu0 0
      %705 = vmatprep.subr.bf16.mxu0 0
      %706 = vmatpush1.bf16.msra.mxu0 0
      %707 = vmatprep.subr.bf16.mxu0 0
      %708 = vmatpush1.bf16.msra.mxu0 0
      %709 = vmatprep.mubr.bf16.mxu0 0
      %710 = vmatmul.mubr.bf16.gmra.mrb[0].mxu0 %v669
      %v711 = vpop.f32.mrb[0].mxu0
      %v712 = vadd.f32 0.0, %v711
      %v713 = vpop.f32.mrb[0].mxu0
      %v714 = vadd.f32 0.0, %v713
      %v715 = vpop.f32.mrb[0].mxu0
      %v716 = vpop.f32.mrb[0].mxu0
      %717 = vdwg.mxu0
      %v718 = vadd.f32 %v658, %v712
      %v719 = vadd.f32 %v659, %v714
      %s720 = scalar_lea.vmem %s245, 28
      %v721 = vld [vmem:[%s720] sm:$0xf]
      %s722 = scalar_lea.vmem %s238, 40
      %v723 = vld [vmem:[%s722] sm:$0xff]
      %v725 = vunpack.c.l.b16 %v723
      %v726 = vunpack.c.h.b16 %v723
      %v727 = vpack.c.b16 %v725, %v725
      %v728 = vpack.c.b16 %v726, %v726
      %v730 = vsel %vm287, %v721, 0
      %v733 = vsel %vm291, %v727, 0
      %v736 = vsel %vm291, %v728, 0
      %738 = vmatprep.subr.bf16.mxu0 %v736
      %739 = vmatpush1.bf16.msra.mxu0 %v733
      %740 = vmatprep.subr.bf16.mxu0 0
      %741 = vmatpush1.bf16.msra.mxu0 0
      %742 = vmatprep.subr.bf16.mxu0 0
      %743 = vmatpush1.bf16.msra.mxu0 0
      %744 = vmatprep.subr.bf16.mxu0 0
      %745 = vmatpush1.bf16.msra.mxu0 0
      %746 = vmatprep.subr.bf16.mxu0 0
      %747 = vmatpush1.bf16.msra.mxu0 0
      %748 = vmatprep.subr.bf16.mxu0 0
      %749 = vmatpush1.bf16.msra.mxu0 0
      %750 = vmatprep.subr.bf16.mxu0 0
      %751 = vmatpush1.bf16.msra.mxu0 0
      %752 = vmatprep.subr.bf16.mxu0 0
      %753 = vmatpush1.bf16.msra.mxu0 0
      %754 = vmatprep.subr.bf16.mxu0 0
      %755 = vmatpush1.bf16.msra.mxu0 0
      %756 = vmatprep.subr.bf16.mxu0 0
      %757 = vmatpush1.bf16.msra.mxu0 0
      %758 = vmatprep.subr.bf16.mxu0 0
      %759 = vmatpush1.bf16.msra.mxu0 0
      %760 = vmatprep.subr.bf16.mxu0 0
      %761 = vmatpush1.bf16.msra.mxu0 0
      %762 = vmatprep.subr.bf16.mxu0 0
      %763 = vmatpush1.bf16.msra.mxu0 0
      %764 = vmatprep.subr.bf16.mxu0 0
      %765 = vmatpush1.bf16.msra.mxu0 0
      %766 = vmatprep.subr.bf16.mxu0 0
      %767 = vmatpush1.bf16.msra.mxu0 0
      %768 = vmatprep.subr.bf16.mxu0 0
      %769 = vmatpush1.bf16.msra.mxu0 0
      %770 = vmatprep.mubr.bf16.mxu0 0
      %771 = vmatmul.mubr.bf16.gmra.mrb[0].mxu0 %v730
      %v772 = vpop.f32.mrb[0].mxu0
      %v773 = vadd.f32 0.0, %v772
      %v774 = vpop.f32.mrb[0].mxu0
      %v775 = vadd.f32 0.0, %v774
      %v776 = vpop.f32.mrb[0].mxu0
      %v777 = vpop.f32.mrb[0].mxu0
      %778 = vdwg.mxu0
      %v779 = vadd.f32 %v718, %v773
      %v780 = vadd.f32 %v719, %v775
      %781 = vst [vmem:[%s657] sm:$0xff] %v779
      %782 = vst [vmem:[%s657 + $0x8] sm:$0xff] %v780
      // Predicated region
      $region37: #{deconv_block_forward.1} parent=31 // pred_check
        %p783 = pneg %p260
      $region38: #{deconv_block_forward.1} parent=31 // pred_check_branch
        %785 = sbr.rel (%p783) target = $region40
      $region39: #{deconv_block_forward.1} parent=31 // pred_region
        %v786 = vld [vmem:[#allocation2] sm:$0xff]
        %v787 = vld [vmem:[#allocation2 + $0x8] sm:$0xff]
        %v788 = vadd.f32 %v786, %v787
        %789 = vadd.xlane.f32.xlu0 %v788
        %v790 = vpop.xlane.xlu0 %789
        %v791 = vmul.f32 %v786, %v786
        %v792 = vmul.f32 %v787, %v787
        %v793 = vadd.f32 %v791, %v792
        %794 = vadd.xlane.f32.xlu0 %v793
        %v795 = vpop.xlane.xlu0 %794
        %v796 = vld [vmem:[%s404] sm:$0xff]
        %v797 = vld [vmem:[%s404 + $0x8] sm:$0xff]
        %v798 = vadd.f32 %v796, %v797
        %799 = vadd.xlane.f32.xlu0 %v798
        %v800 = vpop.xlane.xlu0 %799
        %v801 = vadd.f32 %v790, %v800
        %v802 = vmul.f32 %v796, %v796
        %v803 = vmul.f32 %v797, %v797
        %v804 = vadd.f32 %v802, %v803
        %805 = vadd.xlane.f32.xlu0 %v804
        %v806 = vpop.xlane.xlu0 %805
        %v807 = vadd.f32 %v795, %v806
        %v808 = vld [vmem:[%s531] sm:$0xff]
        %v809 = vld [vmem:[%s531 + $0x8] sm:$0xff]
        %v810 = vadd.f32 %v808, %v809
        %811 = vadd.xlane.f32.xlu0 %v810
        %v812 = vpop.xlane.xlu0 %811
        %v813 = vadd.f32 %v801, %v812
        %v814 = vmul.f32 %v808, %v808
        %v815 = vmul.f32 %v809, %v809
        %v816 = vadd.f32 %v814, %v815
        %817 = vadd.xlane.f32.xlu0 %v816
        %v818 = vpop.xlane.xlu0 %817
        %v819 = vadd.f32 %v807, %v818
        %v820 = vld [vmem:[%s657] sm:$0xff]
        %v821 = vld [vmem:[%s657 + $0x8] sm:$0xff]
        %v822 = vadd.f32 %v820, %v821
        %823 = vadd.xlane.f32.xlu0 %v822
        %v824 = vpop.xlane.xlu0 %823
        %v825 = vadd.f32 %v813, %v824
        %v826 = vmul.f32 %v820, %v820
        %v827 = vmul.f32 %v821, %v821
        %v828 = vadd.f32 %v826, %v827
        %829 = vadd.xlane.f32.xlu0 %v828
        %v830 = vpop.xlane.xlu0 %829
        %v831 = vadd.f32 %v819, %v830
        %v832 = vmul.f32 %v825, 0.0009765625
        %v833 = vmul.f32 %v831, 0.0009765625
        %v834 = vmul.f32 %v832, %v832
        %v835 = vsub.f32 %v833, %v834
        %v836 = vmax.f32 %v835, 0.0
        %v837 = vadd.f32 %v836, 1e-05
        %v838 = vrsqrt.pop %v837
        %v839 = vsub.f32 %v786, %v832
        %v840 = vsub.f32 %v787, %v832
        %v841 = vmul.f32 %v839, %v838
        %v842 = vmul.f32 %v840, %v838
        %843 = vst [vmem:[%s258] sm:$0xff] %v841
        %844 = vst [vmem:[%s258 + $0x8] sm:$0xff] %v842
        %v845 = vld [vmem:[%s404] sm:$0xff]
        %v846 = vld [vmem:[%s404 + $0x8] sm:$0xff]
        %v847 = vsub.f32 %v845, %v832
        %v848 = vsub.f32 %v846, %v832
        %v849 = vmul.f32 %v847, %v838
        %v850 = vmul.f32 %v848, %v838
        %s851 = scalar_lea.vmem %s258, 16
        %852 = vst [vmem:[%s851] sm:$0xff] %v849
        %853 = vst [vmem:[%s851 + $0x8] sm:$0xff] %v850
        %v854 = vld [vmem:[%s531] sm:$0xff]
        %v855 = vld [vmem:[%s531 + $0x8] sm:$0xff]
        %v856 = vsub.f32 %v854, %v832
        %v857 = vsub.f32 %v855, %v832
        %v858 = vmul.f32 %v856, %v838
        %v859 = vmul.f32 %v857, %v838
        %s860 = scalar_lea.vmem %s258, 32
        %861 = vst [vmem:[%s860] sm:$0xff] %v858
        %862 = vst [vmem:[%s860 + $0x8] sm:$0xff] %v859
        %v863 = vld [vmem:[%s657] sm:$0xff]
        %v864 = vld [vmem:[%s657 + $0x8] sm:$0xff]
        %v865 = vsub.f32 %v863, %v832
        %v866 = vsub.f32 %v864, %v832
        %v867 = vmul.f32 %v865, %v838
        %v868 = vmul.f32 %v866, %v838
        %s869 = scalar_lea.vmem %s258, 48
        %870 = vst [vmem:[%s869] sm:$0xff] %v867
        %871 = vst [vmem:[%s869 + $0x8] sm:$0xff] %v868
      $region40: #{deconv_block_forward.1} parent=31 // pred_fallthru
        _
      %p872 = scmp.lt.s32.totalorder %s19, 1
      %s873 = scalar_select %p872, %s19, 1
      %p874 = scmp.lt.s32.totalorder %s20, 0
      %s875 = scalar_select %p874, %s20, 0
      %s876 = smul.addr %s875, 2
      %s877 = smul.addr %s873, 8
      %s878 = sadd.s32 %s876, %s877
      %s879 = smul.addr %s878, 8
      %s880 = scalar_lea.vmem %s3, %s879
      // Predicated region
      $region41: #{deconv_block_forward.1} parent=31 // pred_check
        %p881 = pneg %p135
      $region42: #{deconv_block_forward.1} parent=31 // pred_check_branch
        %883 = sbr.rel (%p881) target = $region44
      $region43: #{deconv_block_forward.1} parent=31 // pred_region
        _
      $region44: #{deconv_block_forward.1} parent=31 // pred_fallthru
        _
    $region32: #{deconv_block_forward.1} parent=5 // pred_fallthru
      _
    %p884 = scmp.le.s32.totalorder 2, %s9
    // Predicated region
    $region45: #{deconv_block_forward.1} parent=5 // pred_check
      %p885 = pneg %p884
    $region46: #{deconv_block_forward.1} parent=5 // pred_check_branch
      %887 = sbr.rel (%p885) target = $region48
    $region47: #{deconv_block_forward.1} parent=5 // pred_region
      %s888 = ssub.s32 %s9, 2
      // Predicated region
      $region49: #{deconv_block_forward.1} parent=47 // pred_check
        %p889 = pneg %p141
      $region50: #{deconv_block_forward.1} parent=47 // pred_check_branch
        %891 = sbr.rel (%p889) target = $region52
      $region51: #{deconv_block_forward.1} parent=47 // pred_region
        %p892 = scmp.lt.s32.totalorder %s22, 1
        %s893 = scalar_select %p892, %s22, 1
        %p894 = scmp.lt.s32.totalorder %s23, 0
        %s895 = scalar_select %p894, %s23, 0
        %s896 = smul.addr %s895, 2
        %s897 = smul.addr %s893, 8
        %s898 = sadd.s32 %s896, %s897
        %s899 = smul.addr %s898, 8
        %s900 = scalar_lea.vmem %s3, %s899
      $region52: #{deconv_block_forward.1} parent=47 // pred_fallthru
        _
    $region48: #{deconv_block_forward.1} parent=5 // pred_fallthru
      _
  $region6: #{deconv_block_forward.1} parent=0 // loop_footer
    %s13 = sadd.s32 1, %s9
  $region7: #{deconv_block_forward.1} parent=0 // loop_footer_branch
    %8 = sbr.rel target = $region3
  $region8: #{deconv_block_forward.1} parent=0 // loop_exit
    _

</llo_original>
